<compile_context>
chip_gen: v7x
topology: tpu7x:2x2x1
jax: 0.10.0
libtpu: 0.0.40
codegen_flags: <defaults>
</compile_context>

<pallas_src>
import functools

import jax
import jax.numpy as jnp
from jax import lax
from jax.experimental import pallas as pl
from jax.experimental.pallas import tpu as pltpu


def _lstm_chunk_kernel(xw_ref, whh_t_ref, out_ref, h_scr, c_scr, *,
                       chunk_t, batch, hidden, seq_len, padded_steps):
    """One time-chunk of the LSTM recurrence.

    xw_ref   : (chunk_t * batch, 4H) f32  -- gathered fused-table rows for this
               chunk (embed @ W_ih^T + b_ih + b_hh, g-gate columns pre-scaled 2x)
    whh_t_ref: (H, 4H) bf16               -- W_hh^T, g-gate columns pre-scaled 2x
    out_ref  : (batch, H) f32             -- h at the last valid time step
    h_scr/c_scr : (batch, H) f32 VMEM scratch persisting across grid chunks
    """
    t_chunk = pl.program_id(0)
    needs_mask = (padded_steps != seq_len)   # static Python bool

    @pl.when(t_chunk == 0)
    def _():
        h_scr[...] = jnp.zeros_like(h_scr)
        c_scr[...] = jnp.zeros_like(c_scr)

    whh_t = whh_t_ref[...]

    def step(i, carry):
        h, c = carry
        # Serial hot path: one (B,H)@(H,4H) bf16 MXU matmul + elementwise tail.
        hw = jnp.dot(h.astype(whh_t.dtype), whh_t,
                     preferred_element_type=jnp.float32)          # (B, 4H) f32
        row = pl.multiple_of(i * batch, 8)
        gates = xw_ref[pl.ds(row, batch), :] + hw                 # order i,f,g,o
        # Single whole-vreg sigmoid (one EUP push); g via 2*sigmoid(2x)-1.
        sig = jax.nn.sigmoid(gates)
        i_g = sig[:, 0:hidden]
        f_g = sig[:, hidden:2 * hidden]
        g_g = 2.0 * sig[:, 2 * hidden:3 * hidden] - 1.0           # == tanh(pre_g)
        o_g = sig[:, 3 * hidden:4 * hidden]
        c_new = f_g * c + i_g * g_g
        h_new = o_g * jnp.tanh(c_new)
        if needs_mask:
            valid = (t_chunk * chunk_t + i) < seq_len
            h_new = jnp.where(valid, h_new, h)
            c_new = jnp.where(valid, c_new, c)
        return h_new, c_new

    h, c = lax.fori_loop(0, chunk_t, step, (h_scr[...], c_scr[...]),
                         unroll=min(8, chunk_t))
    h_scr[...] = h
    c_scr[...] = c

    @pl.when(t_chunk == pl.num_programs(0) - 1)
    def _():
        out_ref[...] = h


def _round_up(x, m):
    return (x + m - 1) // m * m


@functools.partial(jax.jit, static_argnames=("char_hidden",))
def char_lstm_forward(x_idx, embed_w, w_ih, w_hh, b_ih, b_hh, *, char_hidden):
    """Forward pass equivalent to char_lstm.forward(x).

    x_idx   : (seq_len, batch) int32 character indices
    embed_w : (n_char, char_dim) f32
    w_ih    : (4*H, char_dim) f32   (PyTorch weight_ih_l0)
    w_hh    : (4*H, H) f32          (PyTorch weight_hh_l0)
    b_ih    : (4*H,) f32
    b_hh    : (4*H,) f32
    returns : (batch, H) f32  == out[-1]
    """
    seq_len, batch = x_idx.shape
    H = char_hidden

    # --- Algebraic fold: embedding + input projection + both biases -> one table.
    # g-gate (columns 2H:3H) pre-scaled by 2 so the kernel can use
    # tanh(x) = 2*sigmoid(2x) - 1 (power-of-two scaling is exact in fp).
    gate_scale = jnp.concatenate([jnp.ones((2 * H,), jnp.float32),
                                  jnp.full((H,), 2.0, jnp.float32),
                                  jnp.ones((H,), jnp.float32)])
    fused = (jnp.dot(embed_w, w_ih.T, precision=lax.Precision.HIGHEST)
             + (b_ih + b_hh)) * gate_scale                         # (n_char, 4H) f32
    whh_t = (w_hh.T * gate_scale).astype(jnp.bfloat16)             # (H, 4H) bf16

    # --- Pad batch (sublane) to a multiple of 8, time to a multiple of chunk_t.
    batch_pad = max(8, _round_up(batch, 8))
    chunk_t = min(seq_len, 32)
    seq_pad = _round_up(seq_len, chunk_t)
    num_chunks = seq_pad // chunk_t

    x_pad = jnp.zeros((seq_pad, batch_pad), jnp.int32)
    x_pad = x_pad.at[:seq_len, :batch].set(x_idx.astype(jnp.int32))

    # Per-token work outside the recurrence is now just a row gather on the
    # (n_char, 4H) table (stays f32 -> no bf16 rounding on the input path).
    xw = jnp.take(fused, x_pad.reshape(-1), axis=0)                # (S_pad*B_pad, 4H)

    kernel = functools.partial(_lstm_chunk_kernel, chunk_t=chunk_t,
                               batch=batch_pad, hidden=H,
                               seq_len=seq_len, padded_steps=seq_pad)

    out_pad = pl.pallas_call(
        kernel,
        out_shape=jax.ShapeDtypeStruct((batch_pad, H), jnp.float32),
        grid=(num_chunks,),
        in_specs=[
            pl.BlockSpec((chunk_t * batch_pad, 4 * H), lambda t: (t, 0)),
            pl.BlockSpec((H, 4 * H), lambda t: (0, 0)),
        ],
        out_specs=pl.BlockSpec((batch_pad, H), lambda t: (0, 0)),
        scratch_shapes=[pltpu.VMEM((batch_pad, H), jnp.float32),
                        pltpu.VMEM((batch_pad, H), jnp.float32)],
        compiler_params=pltpu.CompilerParams(
            dimension_semantics=("arbitrary",)),
    )(xw, whh_t)
    return out_pad[:batch]


def _lstm_reference(x_idx, embed_w, w_ih, w_hh, b_ih, b_hh, *, recur_bf16=False):
    """Pure-JAX reference matching torch.nn.LSTM semantics.

    recur_bf16=True mirrors the kernel's bf16 recurrent-matmul operands
    (f32 accumulate, f32 input projection / elementwise) for a matched-precision
    comparison.
    """
    seq_len, batch = x_idx.shape
    hidden = w_hh.shape[1]
    x_emb = jnp.take(embed_w, x_idx, axis=0)                       # (S, B, D) f32
    xw = (jnp.einsum("sbd,hd->sbh", x_emb, w_ih,
                     precision=lax.Precision.HIGHEST)
          + (b_ih + b_hh))                                         # (S, B, 4H) f32
    whh_t = w_hh.T.astype(jnp.bfloat16) if recur_bf16 else w_hh.T
    h = jnp.zeros((batch, hidden), jnp.float32)
    c = jnp.zeros((batch, hidden), jnp.float32)
    for t in range(seq_len):
        hh = h.astype(whh_t.dtype)
        gates = xw[t] + jnp.dot(hh, whh_t, preferred_element_type=jnp.float32)
        i_g = jax.nn.sigmoid(gates[:, 0:hidden])
        f_g = jax.nn.sigmoid(gates[:, hidden:2 * hidden])
        g_g = jnp.tanh(gates[:, 2 * hidden:3 * hidden])
        o_g = jax.nn.sigmoid(gates[:, 3 * hidden:4 * hidden])
        c = f_g * c + i_g * g_g
        h = o_g * jnp.tanh(c)
    return h


if __name__ == "__main__":
    # Small, deterministic configuration.
    n_char, char_dim, char_hidden = 16, 8, 32
    seq_len, batch = 8, 2

    key = jax.random.PRNGKey(0)
    k_emb, k_wih, k_whh, k_bih, k_bhh, k_idx = jax.random.split(key, 6)

    # nn.Embedding: N(0, 1); nn.LSTM params: U(-1/sqrt(H), 1/sqrt(H)).
    embed_w = jax.random.normal(k_emb, (n_char, char_dim), jnp.float32)
    bound = 1.0 / jnp.sqrt(jnp.float32(char_hidden))
    w_ih = jax.random.uniform(k_wih, (4 * char_hidden, char_dim), jnp.float32,
                              -bound, bound)
    w_hh = jax.random.uniform(k_whh, (4 * char_hidden, char_hidden), jnp.float32,
                              -bound, bound)
    b_ih = jax.random.uniform(k_bih, (4 * char_hidden,), jnp.float32, -bound, bound)
    b_hh = jax.random.uniform(k_bhh, (4 * char_hidden,), jnp.float32, -bound, bound)

    x_idx = jax.random.randint(k_idx, (seq_len, batch), 0, n_char, jnp.int32)

    out = char_lstm_forward(x_idx, embed_w, w_ih, w_hh, b_ih, b_hh,
                            char_hidden=char_hidden)
    out = jax.block_until_ready(out)
    assert out.shape == (batch, char_hidden)

    # Matched-precision (bf16 recurrent matmul) reference: tight agreement.
    ref_bf16 = _lstm_reference(x_idx, embed_w, w_ih, w_hh, b_ih, b_hh,
                               recur_bf16=True)
    assert jnp.allclose(out, ref_bf16, atol=5e-3, rtol=5e-3), \
        "mismatch vs matched-precision reference"

    # Full-f32 reference (PyTorch semantics): looser tolerance, only the
    # recurrent matmul operands are bf16 in the kernel.
    ref_f32 = _lstm_reference(x_idx, embed_w, w_ih, w_hh, b_ih, b_hh)
    assert jnp.allclose(out, ref_f32, atol=2e-2, rtol=2e-2), \
        "mismatch vs f32 reference"

    print("KERNEL_OK")
</pallas_src>

<mosaic_0001>
module attributes {stable_mosaic.version = 11 : i64} {
  func.func @_lstm_chunk_kernel(%arg0: i32, %arg1: memref<64x128xf32, #tpu.memory_space<vmem>>, %arg2: memref<32x128xbf16, #tpu.memory_space<vmem>>, %arg3: memref<8x32xf32, #tpu.memory_space<vmem>>, %arg4: memref<8x32xf32, #tpu.memory_space<vmem>>, %arg5: memref<8x32xf32, #tpu.memory_space<vmem>>) attributes {dimension_semantics = [#tpu.dimension_semantics<arbitrary>], iteration_bounds = array<i64: 1>, scalar_prefetch = 0 : i64, scratch_operands = 2 : i64, tpu.core_type = #tpu.core_type<tc>, window_params = [{transform_indices = @transform_0, window_bounds = array<i64: 64, 128>}, {pipeline_mode = #tpu.pipeline_mode<synchronous>, transform_indices = @transform_1, window_bounds = array<i64: 32, 128>}, {pipeline_mode = #tpu.pipeline_mode<synchronous>, transform_indices = @transform_2, window_bounds = array<i64: 8, 32>}]} {
    %c0_i32 = arith.constant 0 : i32
    %0 = arith.cmpi eq, %arg0, %c0_i32 : i32
    %1 = arith.extui %0 : i1 to i32
    %c0_i32_0 = arith.constant 0 : i32
    %2 = arith.cmpi ne, %1, %c0_i32_0 : i32
    scf.if %2 {
      %cst_60 = arith.constant 0.000000e+00 : f32
      %211 = vector.broadcast %cst_60 : f32 to vector<8x32xf32>
      %c0_61 = arith.constant 0 : index
      %c0_62 = arith.constant 0 : index
      %212 = vector.load %arg4[%c0_61, %c0_62] : memref<8x32xf32, #tpu.memory_space<vmem>>, vector<8x32xf32>
      tpu.vector_store %arg4[%c0_61, %c0_62], %211 {strides = array<i32>} : memref<8x32xf32, #tpu.memory_space<vmem>>, vector<8x32xf32>,
      %cst_63 = arith.constant 0.000000e+00 : f32
      %213 = vector.broadcast %cst_63 : f32 to vector<8x32xf32>
      %c0_64 = arith.constant 0 : index
      %c0_65 = arith.constant 0 : index
      %214 = vector.load %arg5[%c0_64, %c0_65] : memref<8x32xf32, #tpu.memory_space<vmem>>, vector<8x32xf32>
      tpu.vector_store %arg5[%c0_64, %c0_65], %213 {strides = array<i32>} : memref<8x32xf32, #tpu.memory_space<vmem>>, vector<8x32xf32>,
    } else {
    }
    %c0 = arith.constant 0 : index
    %c0_1 = arith.constant 0 : index
    %3 = vector.load %arg2[%c0, %c0_1] : memref<32x128xbf16, #tpu.memory_space<vmem>>, vector<32x128xbf16>
    %c0_2 = arith.constant 0 : index
    %c0_3 = arith.constant 0 : index
    %4 = vector.load %arg4[%c0_2, %c0_3] : memref<8x32xf32, #tpu.memory_space<vmem>>, vector<8x32xf32>
    %c0_4 = arith.constant 0 : index
    %c0_5 = arith.constant 0 : index
    %5 = vector.load %arg5[%c0_4, %c0_5] : memref<8x32xf32, #tpu.memory_space<vmem>>, vector<8x32xf32>
    %c0_i32_6 = arith.constant 0 : i32
    %6 = arith.truncf %4 : vector<8x32xf32> to vector<8x32xbf16>
    %cst = arith.constant dense<0.000000e+00> : vector<8x128xf32>
    %7 = tpu.matmul %6, %3, %cst {dimension_numbers = #tpu.dot_dimension_numbers<[1], [0], [0], [1], [0, 0, 1, 1], [], []>} : vector<8x32xbf16>, vector<32x128xbf16>, vector<8x128xf32> -> vector<8x128xf32>
    %c8_i32 = arith.constant 8 : i32
    %8 = arith.muli %c0_i32_6, %c8_i32 : i32
    %9 = tpu.assume_multiple %8, 8 : i32
    %10 = arith.index_cast %9 : i32 to index
    %c0_7 = arith.constant 0 : index
    %11 = vector.load %arg1[%10, %c0_7] : memref<64x128xf32, #tpu.memory_space<vmem>>, vector<8x128xf32>
    %12 = arith.addf %11, %7 : vector<8x128xf32>
    %13 = arith.negf %12 : vector<8x128xf32>
    %14 = math.exp %13 : vector<8x128xf32>
    %cst_8 = arith.constant 1.000000e+00 : f32
    %15 = vector.broadcast %cst_8 : f32 to vector<8x128xf32>
    %16 = arith.addf %15, %14 : vector<8x128xf32>
    %17 = arith.divf %15, %16 : vector<8x128xf32>
    %18 = vector.extract_strided_slice %17 {offsets = [0, 0], sizes = [8, 32], strides = [1, 1]} : vector<8x128xf32> to vector<8x32xf32>
    %19 = vector.extract_strided_slice %17 {offsets = [0, 32], sizes = [8, 32], strides = [1, 1]} : vector<8x128xf32> to vector<8x32xf32>
    %20 = vector.extract_strided_slice %17 {offsets = [0, 64], sizes = [8, 32], strides = [1, 1]} : vector<8x128xf32> to vector<8x32xf32>
    %cst_9 = arith.constant 2.000000e+00 : f32
    %21 = vector.broadcast %cst_9 : f32 to vector<8x32xf32>
    %22 = arith.mulf %21, %20 : vector<8x32xf32>
    %cst_10 = arith.constant 1.000000e+00 : f32
    %23 = vector.broadcast %cst_10 : f32 to vector<8x32xf32>
    %24 = arith.subf %22, %23 : vector<8x32xf32>
    %25 = vector.extract_strided_slice %17 {offsets = [0, 96], sizes = [8, 32], strides = [1, 1]} : vector<8x128xf32> to vector<8x32xf32>
    %26 = arith.mulf %19, %5 : vector<8x32xf32>
    %27 = arith.mulf %18, %24 : vector<8x32xf32>
    %28 = arith.addf %26, %27 : vector<8x32xf32>
    %29 = math.tanh %28 : vector<8x32xf32>
    %30 = arith.mulf %25, %29 : vector<8x32xf32>
    %c1_i32 = arith.constant 1 : i32
    %31 = arith.truncf %30 : vector<8x32xf32> to vector<8x32xbf16>
    %cst_11 = arith.constant dense<0.000000e+00> : vector<8x128xf32>
    %32 = tpu.matmul %31, %3, %cst_11 {dimension_numbers = #tpu.dot_dimension_numbers<[1], [0], [0], [1], [0, 0, 1, 1], [], []>} : vector<8x32xbf16>, vector<32x128xbf16>, vector<8x128xf32> -> vector<8x128xf32>
    %c8_i32_12 = arith.constant 8 : i32
    %33 = arith.muli %c1_i32, %c8_i32_12 : i32
    %34 = tpu.assume_multiple %33, 8 : i32
    %35 = arith.index_cast %34 : i32 to index
    %c0_13 = arith.constant 0 : index
    %36 = vector.load %arg1[%35, %c0_13] : memref<64x128xf32, #tpu.memory_space<vmem>>, vector<8x128xf32>
    %37 = arith.addf %36, %32 : vector<8x128xf32>
    %38 = arith.negf %37 : vector<8x128xf32>
    %39 = math.exp %38 : vector<8x128xf32>
    %cst_14 = arith.constant 1.000000e+00 : f32
    %40 = vector.broadcast %cst_14 : f32 to vector<8x128xf32>
    %41 = arith.addf %40, %39 : vector<8x128xf32>
    %42 = arith.divf %40, %41 : vector<8x128xf32>
    %43 = vector.extract_strided_slice %42 {offsets = [0, 0], sizes = [8, 32], strides = [1, 1]} : vector<8x128xf32> to vector<8x32xf32>
    %44 = vector.extract_strided_slice %42 {offsets = [0, 32], sizes = [8, 32], strides = [1, 1]} : vector<8x128xf32> to vector<8x32xf32>
    %45 = vector.extract_strided_slice %42 {offsets = [0, 64], sizes = [8, 32], strides = [1, 1]} : vector<8x128xf32> to vector<8x32xf32>
    %cst_15 = arith.constant 2.000000e+00 : f32
    %46 = vector.broadcast %cst_15 : f32 to vector<8x32xf32>
    %47 = arith.mulf %46, %45 : vector<8x32xf32>
    %cst_16 = arith.constant 1.000000e+00 : f32
    %48 = vector.broadcast %cst_16 : f32 to vector<8x32xf32>
    %49 = arith.subf %47, %48 : vector<8x32xf32>
    %50 = vector.extract_strided_slice %42 {offsets = [0, 96], sizes = [8, 32], strides = [1, 1]} : vector<8x128xf32> to vector<8x32xf32>
    %51 = arith.mulf %44, %28 : vector<8x32xf32>
    %52 = arith.mulf %43, %49 : vector<8x32xf32>
    %53 = arith.addf %51, %52 : vector<8x32xf32>
    %54 = math.tanh %53 : vector<8x32xf32>
    %55 = arith.mulf %50, %54 : vector<8x32xf32>
    %c2_i32 = arith.constant 2 : i32
    %56 = arith.truncf %55 : vector<8x32xf32> to vector<8x32xbf16>
    %cst_17 = arith.constant dense<0.000000e+00> : vector<8x128xf32>
    %57 = tpu.matmul %56, %3, %cst_17 {dimension_numbers = #tpu.dot_dimension_numbers<[1], [0], [0], [1], [0, 0, 1, 1], [], []>} : vector<8x32xbf16>, vector<32x128xbf16>, vector<8x128xf32> -> vector<8x128xf32>
    %c8_i32_18 = arith.constant 8 : i32
    %58 = arith.muli %c2_i32, %c8_i32_18 : i32
    %59 = tpu.assume_multiple %58, 8 : i32
    %60 = arith.index_cast %59 : i32 to index
    %c0_19 = arith.constant 0 : index
    %61 = vector.load %arg1[%60, %c0_19] : memref<64x128xf32, #tpu.memory_space<vmem>>, vector<8x128xf32>
    %62 = arith.addf %61, %57 : vector<8x128xf32>
    %63 = arith.negf %62 : vector<8x128xf32>
    %64 = math.exp %63 : vector<8x128xf32>
    %cst_20 = arith.constant 1.000000e+00 : f32
    %65 = vector.broadcast %cst_20 : f32 to vector<8x128xf32>
    %66 = arith.addf %65, %64 : vector<8x128xf32>
    %67 = arith.divf %65, %66 : vector<8x128xf32>
    %68 = vector.extract_strided_slice %67 {offsets = [0, 0], sizes = [8, 32], strides = [1, 1]} : vector<8x128xf32> to vector<8x32xf32>
    %69 = vector.extract_strided_slice %67 {offsets = [0, 32], sizes = [8, 32], strides = [1, 1]} : vector<8x128xf32> to vector<8x32xf32>
    %70 = vector.extract_strided_slice %67 {offsets = [0, 64], sizes = [8, 32], strides = [1, 1]} : vector<8x128xf32> to vector<8x32xf32>
    %cst_21 = arith.constant 2.000000e+00 : f32
    %71 = vector.broadcast %cst_21 : f32 to vector<8x32xf32>
    %72 = arith.mulf %71, %70 : vector<8x32xf32>
    %cst_22 = arith.constant 1.000000e+00 : f32
    %73 = vector.broadcast %cst_22 : f32 to vector<8x32xf32>
    %74 = arith.subf %72, %73 : vector<8x32xf32>
    %75 = vector.extract_strided_slice %67 {offsets = [0, 96], sizes = [8, 32], strides = [1, 1]} : vector<8x128xf32> to vector<8x32xf32>
    %76 = arith.mulf %69, %53 : vector<8x32xf32>
    %77 = arith.mulf %68, %74 : vector<8x32xf32>
    %78 = arith.addf %76, %77 : vector<8x32xf32>
    %79 = math.tanh %78 : vector<8x32xf32>
    %80 = arith.mulf %75, %79 : vector<8x32xf32>
    %c3_i32 = arith.constant 3 : i32
    %81 = arith.truncf %80 : vector<8x32xf32> to vector<8x32xbf16>
    %cst_23 = arith.constant dense<0.000000e+00> : vector<8x128xf32>
    %82 = tpu.matmul %81, %3, %cst_23 {dimension_numbers = #tpu.dot_dimension_numbers<[1], [0], [0], [1], [0, 0, 1, 1], [], []>} : vector<8x32xbf16>, vector<32x128xbf16>, vector<8x128xf32> -> vector<8x128xf32>
    %c8_i32_24 = arith.constant 8 : i32
    %83 = arith.muli %c3_i32, %c8_i32_24 : i32
    %84 = tpu.assume_multiple %83, 8 : i32
    %85 = arith.index_cast %84 : i32 to index
    %c0_25 = arith.constant 0 : index
    %86 = vector.load %arg1[%85, %c0_25] : memref<64x128xf32, #tpu.memory_space<vmem>>, vector<8x128xf32>
    %87 = arith.addf %86, %82 : vector<8x128xf32>
    %88 = arith.negf %87 : vector<8x128xf32>
    %89 = math.exp %88 : vector<8x128xf32>
    %cst_26 = arith.constant 1.000000e+00 : f32
    %90 = vector.broadcast %cst_26 : f32 to vector<8x128xf32>
    %91 = arith.addf %90, %89 : vector<8x128xf32>
    %92 = arith.divf %90, %91 : vector<8x128xf32>
    %93 = vector.extract_strided_slice %92 {offsets = [0, 0], sizes = [8, 32], strides = [1, 1]} : vector<8x128xf32> to vector<8x32xf32>
    %94 = vector.extract_strided_slice %92 {offsets = [0, 32], sizes = [8, 32], strides = [1, 1]} : vector<8x128xf32> to vector<8x32xf32>
    %95 = vector.extract_strided_slice %92 {offsets = [0, 64], sizes = [8, 32], strides = [1, 1]} : vector<8x128xf32> to vector<8x32xf32>
    %cst_27 = arith.constant 2.000000e+00 : f32
    %96 = vector.broadcast %cst_27 : f32 to vector<8x32xf32>
    %97 = arith.mulf %96, %95 : vector<8x32xf32>
    %cst_28 = arith.constant 1.000000e+00 : f32
    %98 = vector.broadcast %cst_28 : f32 to vector<8x32xf32>
    %99 = arith.subf %97, %98 : vector<8x32xf32>
    %100 = vector.extract_strided_slice %92 {offsets = [0, 96], sizes = [8, 32], strides = [1, 1]} : vector<8x128xf32> to vector<8x32xf32>
    %101 = arith.mulf %94, %78 : vector<8x32xf32>
    %102 = arith.mulf %93, %99 : vector<8x32xf32>
    %103 = arith.addf %101, %102 : vector<8x32xf32>
    %104 = math.tanh %103 : vector<8x32xf32>
    %105 = arith.mulf %100, %104 : vector<8x32xf32>
    %c4_i32 = arith.constant 4 : i32
    %106 = arith.truncf %105 : vector<8x32xf32> to vector<8x32xbf16>
    %cst_29 = arith.constant dense<0.000000e+00> : vector<8x128xf32>
    %107 = tpu.matmul %106, %3, %cst_29 {dimension_numbers = #tpu.dot_dimension_numbers<[1], [0], [0], [1], [0, 0, 1, 1], [], []>} : vector<8x32xbf16>, vector<32x128xbf16>, vector<8x128xf32> -> vector<8x128xf32>
    %c8_i32_30 = arith.constant 8 : i32
    %108 = arith.muli %c4_i32, %c8_i32_30 : i32
    %109 = tpu.assume_multiple %108, 8 : i32
    %110 = arith.index_cast %109 : i32 to index
    %c0_31 = arith.constant 0 : index
    %111 = vector.load %arg1[%110, %c0_31] : memref<64x128xf32, #tpu.memory_space<vmem>>, vector<8x128xf32>
    %112 = arith.addf %111, %107 : vector<8x128xf32>
    %113 = arith.negf %112 : vector<8x128xf32>
    %114 = math.exp %113 : vector<8x128xf32>
    %cst_32 = arith.constant 1.000000e+00 : f32
    %115 = vector.broadcast %cst_32 : f32 to vector<8x128xf32>
    %116 = arith.addf %115, %114 : vector<8x128xf32>
    %117 = arith.divf %115, %116 : vector<8x128xf32>
    %118 = vector.extract_strided_slice %117 {offsets = [0, 0], sizes = [8, 32], strides = [1, 1]} : vector<8x128xf32> to vector<8x32xf32>
    %119 = vector.extract_strided_slice %117 {offsets = [0, 32], sizes = [8, 32], strides = [1, 1]} : vector<8x128xf32> to vector<8x32xf32>
    %120 = vector.extract_strided_slice %117 {offsets = [0, 64], sizes = [8, 32], strides = [1, 1]} : vector<8x128xf32> to vector<8x32xf32>
    %cst_33 = arith.constant 2.000000e+00 : f32
    %121 = vector.broadcast %cst_33 : f32 to vector<8x32xf32>
    %122 = arith.mulf %121, %120 : vector<8x32xf32>
    %cst_34 = arith.constant 1.000000e+00 : f32
    %123 = vector.broadcast %cst_34 : f32 to vector<8x32xf32>
    %124 = arith.subf %122, %123 : vector<8x32xf32>
    %125 = vector.extract_strided_slice %117 {offsets = [0, 96], sizes = [8, 32], strides = [1, 1]} : vector<8x128xf32> to vector<8x32xf32>
    %126 = arith.mulf %119, %103 : vector<8x32xf32>
    %127 = arith.mulf %118, %124 : vector<8x32xf32>
    %128 = arith.addf %126, %127 : vector<8x32xf32>
    %129 = math.tanh %128 : vector<8x32xf32>
    %130 = arith.mulf %125, %129 : vector<8x32xf32>
    %c5_i32 = arith.constant 5 : i32
    %131 = arith.truncf %130 : vector<8x32xf32> to vector<8x32xbf16>
    %cst_35 = arith.constant dense<0.000000e+00> : vector<8x128xf32>
    %132 = tpu.matmul %131, %3, %cst_35 {dimension_numbers = #tpu.dot_dimension_numbers<[1], [0], [0], [1], [0, 0, 1, 1], [], []>} : vector<8x32xbf16>, vector<32x128xbf16>, vector<8x128xf32> -> vector<8x128xf32>
    %c8_i32_36 = arith.constant 8 : i32
    %133 = arith.muli %c5_i32, %c8_i32_36 : i32
    %134 = tpu.assume_multiple %133, 8 : i32
    %135 = arith.index_cast %134 : i32 to index
    %c0_37 = arith.constant 0 : index
    %136 = vector.load %arg1[%135, %c0_37] : memref<64x128xf32, #tpu.memory_space<vmem>>, vector<8x128xf32>
    %137 = arith.addf %136, %132 : vector<8x128xf32>
    %138 = arith.negf %137 : vector<8x128xf32>
    %139 = math.exp %138 : vector<8x128xf32>
    %cst_38 = arith.constant 1.000000e+00 : f32
    %140 = vector.broadcast %cst_38 : f32 to vector<8x128xf32>
    %141 = arith.addf %140, %139 : vector<8x128xf32>
    %142 = arith.divf %140, %141 : vector<8x128xf32>
    %143 = vector.extract_strided_slice %142 {offsets = [0, 0], sizes = [8, 32], strides = [1, 1]} : vector<8x128xf32> to vector<8x32xf32>
    %144 = vector.extract_strided_slice %142 {offsets = [0, 32], sizes = [8, 32], strides = [1, 1]} : vector<8x128xf32> to vector<8x32xf32>
    %145 = vector.extract_strided_slice %142 {offsets = [0, 64], sizes = [8, 32], strides = [1, 1]} : vector<8x128xf32> to vector<8x32xf32>
    %cst_39 = arith.constant 2.000000e+00 : f32
    %146 = vector.broadcast %cst_39 : f32 to vector<8x32xf32>
    %147 = arith.mulf %146, %145 : vector<8x32xf32>
    %cst_40 = arith.constant 1.000000e+00 : f32
    %148 = vector.broadcast %cst_40 : f32 to vector<8x32xf32>
    %149 = arith.subf %147, %148 : vector<8x32xf32>
    %150 = vector.extract_strided_slice %142 {offsets = [0, 96], sizes = [8, 32], strides = [1, 1]} : vector<8x128xf32> to vector<8x32xf32>
    %151 = arith.mulf %144, %128 : vector<8x32xf32>
    %152 = arith.mulf %143, %149 : vector<8x32xf32>
    %153 = arith.addf %151, %152 : vector<8x32xf32>
    %154 = math.tanh %153 : vector<8x32xf32>
    %155 = arith.mulf %150, %154 : vector<8x32xf32>
    %c6_i32 = arith.constant 6 : i32
    %156 = arith.truncf %155 : vector<8x32xf32> to vector<8x32xbf16>
    %cst_41 = arith.constant dense<0.000000e+00> : vector<8x128xf32>
    %157 = tpu.matmul %156, %3, %cst_41 {dimension_numbers = #tpu.dot_dimension_numbers<[1], [0], [0], [1], [0, 0, 1, 1], [], []>} : vector<8x32xbf16>, vector<32x128xbf16>, vector<8x128xf32> -> vector<8x128xf32>
    %c8_i32_42 = arith.constant 8 : i32
    %158 = arith.muli %c6_i32, %c8_i32_42 : i32
    %159 = tpu.assume_multiple %158, 8 : i32
    %160 = arith.index_cast %159 : i32 to index
    %c0_43 = arith.constant 0 : index
    %161 = vector.load %arg1[%160, %c0_43] : memref<64x128xf32, #tpu.memory_space<vmem>>, vector<8x128xf32>
    %162 = arith.addf %161, %157 : vector<8x128xf32>
    %163 = arith.negf %162 : vector<8x128xf32>
    %164 = math.exp %163 : vector<8x128xf32>
    %cst_44 = arith.constant 1.000000e+00 : f32
    %165 = vector.broadcast %cst_44 : f32 to vector<8x128xf32>
    %166 = arith.addf %165, %164 : vector<8x128xf32>
    %167 = arith.divf %165, %166 : vector<8x128xf32>
    %168 = vector.extract_strided_slice %167 {offsets = [0, 0], sizes = [8, 32], strides = [1, 1]} : vector<8x128xf32> to vector<8x32xf32>
    %169 = vector.extract_strided_slice %167 {offsets = [0, 32], sizes = [8, 32], strides = [1, 1]} : vector<8x128xf32> to vector<8x32xf32>
    %170 = vector.extract_strided_slice %167 {offsets = [0, 64], sizes = [8, 32], strides = [1, 1]} : vector<8x128xf32> to vector<8x32xf32>
    %cst_45 = arith.constant 2.000000e+00 : f32
    %171 = vector.broadcast %cst_45 : f32 to vector<8x32xf32>
    %172 = arith.mulf %171, %170 : vector<8x32xf32>
    %cst_46 = arith.constant 1.000000e+00 : f32
    %173 = vector.broadcast %cst_46 : f32 to vector<8x32xf32>
    %174 = arith.subf %172, %173 : vector<8x32xf32>
    %175 = vector.extract_strided_slice %167 {offsets = [0, 96], sizes = [8, 32], strides = [1, 1]} : vector<8x128xf32> to vector<8x32xf32>
    %176 = arith.mulf %169, %153 : vector<8x32xf32>
    %177 = arith.mulf %168, %174 : vector<8x32xf32>
    %178 = arith.addf %176, %177 : vector<8x32xf32>
    %179 = math.tanh %178 : vector<8x32xf32>
    %180 = arith.mulf %175, %179 : vector<8x32xf32>
    %c7_i32 = arith.constant 7 : i32
    %181 = arith.truncf %180 : vector<8x32xf32> to vector<8x32xbf16>
    %cst_47 = arith.constant dense<0.000000e+00> : vector<8x128xf32>
    %182 = tpu.matmul %181, %3, %cst_47 {dimension_numbers = #tpu.dot_dimension_numbers<[1], [0], [0], [1], [0, 0, 1, 1], [], []>} : vector<8x32xbf16>, vector<32x128xbf16>, vector<8x128xf32> -> vector<8x128xf32>
    %c8_i32_48 = arith.constant 8 : i32
    %183 = arith.muli %c7_i32, %c8_i32_48 : i32
    %184 = tpu.assume_multiple %183, 8 : i32
    %185 = arith.index_cast %184 : i32 to index
    %c0_49 = arith.constant 0 : index
    %186 = vector.load %arg1[%185, %c0_49] : memref<64x128xf32, #tpu.memory_space<vmem>>, vector<8x128xf32>
    %187 = arith.addf %186, %182 : vector<8x128xf32>
    %188 = arith.negf %187 : vector<8x128xf32>
    %189 = math.exp %188 : vector<8x128xf32>
    %cst_50 = arith.constant 1.000000e+00 : f32
    %190 = vector.broadcast %cst_50 : f32 to vector<8x128xf32>
    %191 = arith.addf %190, %189 : vector<8x128xf32>
    %192 = arith.divf %190, %191 : vector<8x128xf32>
    %193 = vector.extract_strided_slice %192 {offsets = [0, 0], sizes = [8, 32], strides = [1, 1]} : vector<8x128xf32> to vector<8x32xf32>
    %194 = vector.extract_strided_slice %192 {offsets = [0, 32], sizes = [8, 32], strides = [1, 1]} : vector<8x128xf32> to vector<8x32xf32>
    %195 = vector.extract_strided_slice %192 {offsets = [0, 64], sizes = [8, 32], strides = [1, 1]} : vector<8x128xf32> to vector<8x32xf32>
    %cst_51 = arith.constant 2.000000e+00 : f32
    %196 = vector.broadcast %cst_51 : f32 to vector<8x32xf32>
    %197 = arith.mulf %196, %195 : vector<8x32xf32>
    %cst_52 = arith.constant 1.000000e+00 : f32
    %198 = vector.broadcast %cst_52 : f32 to vector<8x32xf32>
    %199 = arith.subf %197, %198 : vector<8x32xf32>
    %200 = vector.extract_strided_slice %192 {offsets = [0, 96], sizes = [8, 32], strides = [1, 1]} : vector<8x128xf32> to vector<8x32xf32>
    %201 = arith.mulf %194, %178 : vector<8x32xf32>
    %202 = arith.mulf %193, %199 : vector<8x32xf32>
    %203 = arith.addf %201, %202 : vector<8x32xf32>
    %204 = math.tanh %203 : vector<8x32xf32>
    %205 = arith.mulf %200, %204 : vector<8x32xf32>
    %c8_i32_53 = arith.constant 8 : i32
    %c0_54 = arith.constant 0 : index
    %c0_55 = arith.constant 0 : index
    %206 = vector.load %arg4[%c0_54, %c0_55] : memref<8x32xf32, #tpu.memory_space<vmem>>, vector<8x32xf32>
    tpu.vector_store %arg4[%c0_54, %c0_55], %205 {strides = array<i32>} : memref<8x32xf32, #tpu.memory_space<vmem>>, vector<8x32xf32>,
    %c0_56 = arith.constant 0 : index
    %c0_57 = arith.constant 0 : index
    %207 = vector.load %arg5[%c0_56, %c0_57] : memref<8x32xf32, #tpu.memory_space<vmem>>, vector<8x32xf32>
    tpu.vector_store %arg5[%c0_56, %c0_57], %203 {strides = array<i32>} : memref<8x32xf32, #tpu.memory_space<vmem>>, vector<8x32xf32>,
    %c0_i32_58 = arith.constant 0 : i32
    %208 = arith.cmpi eq, %arg0, %c0_i32_58 : i32
    %209 = arith.extui %208 : i1 to i32
    %c0_i32_59 = arith.constant 0 : i32
    %210 = arith.cmpi ne, %209, %c0_i32_59 : i32
    scf.if %210 {
      %c0_60 = arith.constant 0 : index
      %c0_61 = arith.constant 0 : index
      %211 = vector.load %arg3[%c0_60, %c0_61] : memref<8x32xf32, #tpu.memory_space<vmem>>, vector<8x32xf32>
      tpu.vector_store %arg3[%c0_60, %c0_61], %205 {strides = array<i32>} : memref<8x32xf32, #tpu.memory_space<vmem>>, vector<8x32xf32>,
    } else {
    }
    return
  }
  func.func @transform_0(%arg0: i32) -> (i32, i32) {
    %c0_i32 = arith.constant 0 : i32
    %c0_i32_0 = arith.constant 0 : i32
    return %arg0, %c0_i32 : i32, i32
  }
  func.func @transform_1(%arg0: i32) -> (i32, i32) {
    %c0_i32 = arith.constant 0 : i32
    %c0_i32_0 = arith.constant 0 : i32
    %c0_i32_1 = arith.constant 0 : i32
    return %c0_i32, %c0_i32_0 : i32, i32
  }
  func.func @transform_2(%arg0: i32) -> (i32, i32) {
    %c0_i32 = arith.constant 0 : i32
    %c0_i32_0 = arith.constant 0 : i32
    %c0_i32_1 = arith.constant 0 : i32
    return %c0_i32, %c0_i32_0 : i32, i32
  }
}

</mosaic_0001>

<llo_original>
// kernel: char_lstm_forward.1
$region0: #{char_lstm_forward.1}
  #allocation0 [shape = 'u32[]', space=smem, size = 0x4, offset = 0x4, fixed_abs, tag = 'smem constant byte address 0x4 - core index']
  #allocation1 [shape = 'u32[144,128]{1,0:T(1,128)}', space=vmem, size = 0x12000, scoped, tag = 'internal scratch']
  #allocation2 [shape = 'f32[8,32]{1,0:T(8,128)}', space=vmem, size = 0x1000, scoped, tag = 'scratch operand']
  #allocation3 [shape = 'f32[8,32]{1,0:T(8,128)}', space=vmem, size = 0x1000, scoped, tag = 'scratch operand']
  %s0 = inlined_call_operand.vmem [shape: f32[64,128], index: 0, kind: input, shape index: {}]
  %s1 = inlined_call_operand.vmem [shape: bf16[32,128], index: 1, kind: input, shape index: {}]
  %s2 = inlined_call_operand.vmem [shape: f32[8,32], index: 2, kind: output, shape index: {}]
  %s3 = sld [smem:[#allocation0]]
  $region26: #{char_lstm_forward.1} parent=0
    _
  %s5 = ssub.s32 1, %s3
  %s6 = scalar_select 0, %s5, %s3
  // Predicated region
  $region2: #{char_lstm_forward.1} parent=0 // pred_check
    _
  $region3: #{char_lstm_forward.1} parent=0 // pred_check_branch
    %8 = sbr.rel (0) target = $region5
  $region4: #{char_lstm_forward.1} parent=0 // pred_region
    _
  $region5: #{char_lstm_forward.1} parent=0 // pred_fallthru
    _
  // Predicated region
  $region6: #{char_lstm_forward.1} parent=0 // pred_check
    _
  $region7: #{char_lstm_forward.1} parent=0 // pred_check_branch
    %10 = sbr.rel (0) target = $region9
  $region8: #{char_lstm_forward.1} parent=0 // pred_region
    _
  $region9: #{char_lstm_forward.1} parent=0 // pred_fallthru
    _
  %p12 = scmp.eq.s32.totalorder 0, 0
  // Predicated region
  $region10: #{char_lstm_forward.1} parent=0 // pred_check
    %p13 = pneg %p12
  $region11: #{char_lstm_forward.1} parent=0 // pred_check_branch
    %15 = sbr.rel (%p13) target = $region13
  $region12: #{char_lstm_forward.1} parent=0 // pred_region
    %vm16 = vcmask 261120
    %17 = vst.msk [vmem:[#allocation2] sm:$0xff] %vm16, 0.0
    %18 = vst.msk [vmem:[#allocation3] sm:$0xff] %vm16, 0.0
  $region13: #{char_lstm_forward.1} parent=0 // pred_fallthru
    _
  %v19 = vld [vmem:[%s1] sm:$0xf]
  %v20 = vld [vmem:[%s1 + $0x4] sm:$0xf]
  %v21 = vld [vmem:[%s1 + $0x8] sm:$0xf]
  %v22 = vld [vmem:[%s1 + $0xc] sm:$0xf]
  %v23 = vld [vmem:[#allocation2] sm:$0xff]
  %v24 = vld [vmem:[#allocation3] sm:$0xff]
  %v25 = vpack.c.bf16 %v23, %v23
  %v30 = vunpack.c.l.b16 %v19
  %v31 = vunpack.c.l.b16 %v20
  %v32 = vunpack.c.l.b16 %v21
  %v33 = vunpack.c.l.b16 %v22
  %v34 = vpack.c.b16 %v31, %v30
  %v35 = vpack.c.b16 %v33, %v32
  %vm38 = vcmask 261120
  %v40 = vsel %vm38, %v25, 0
  %42 = vmatprep.subr.bf16.mxu0 0
  %43 = vmatpush1.bf16.msra.mxu0 %v34
  %44 = vmatprep.subr.bf16.mxu0 0
  %45 = vmatpush1.bf16.msra.mxu0 %v35
  %46 = vmatprep.subr.bf16.mxu0 0
  %47 = vmatpush1.bf16.msra.mxu0 0
  %48 = vmatprep.subr.bf16.mxu0 0
  %49 = vmatpush1.bf16.msra.mxu0 0
  %50 = vmatprep.subr.bf16.mxu0 0
  %51 = vmatpush1.bf16.msra.mxu0 0
  %52 = vmatprep.subr.bf16.mxu0 0
  %53 = vmatpush1.bf16.msra.mxu0 0
  %54 = vmatprep.subr.bf16.mxu0 0
  %55 = vmatpush1.bf16.msra.mxu0 0
  %56 = vmatprep.subr.bf16.mxu0 0
  %57 = vmatpush1.bf16.msra.mxu0 0
  %58 = vmatprep.subr.bf16.mxu0 0
  %59 = vmatpush1.bf16.msra.mxu0 0
  %60 = vmatprep.subr.bf16.mxu0 0
  %61 = vmatpush1.bf16.msra.mxu0 0
  %62 = vmatprep.subr.bf16.mxu0 0
  %63 = vmatpush1.bf16.msra.mxu0 0
  %64 = vmatprep.subr.bf16.mxu0 0
  %65 = vmatpush1.bf16.msra.mxu0 0
  %66 = vmatprep.subr.bf16.mxu0 0
  %67 = vmatpush1.bf16.msra.mxu0 0
  %68 = vmatprep.subr.bf16.mxu0 0
  %69 = vmatpush1.bf16.msra.mxu0 0
  %70 = vmatprep.subr.bf16.mxu0 0
  %71 = vmatpush1.bf16.msra.mxu0 0
  %72 = vmatprep.subr.bf16.mxu0 0
  %73 = vmatpush1.bf16.msra.mxu0 0
  %74 = vmatprep.mubr.bf16.mxu0 0
  %75 = vmatmul.mubr.bf16.gmra.mrb[0].mxu0 %v40
  %v76 = vpop.f32.mrb[0].mxu0
  %v77 = vadd.f32 0.0, %v76
  %v78 = vpop.f32.mrb[0].mxu0
  %v79 = vpop.f32.mrb[0].mxu0
  %v80 = vpop.f32.mrb[0].mxu0
  %81 = vdwg.mxu0
  %v82 = vld [vmem:[%s0] sm:$0xff]
  %v83 = vadd.f32 %v82, %v77
  %v84 = vxor.u32 %v83, 2147483648
  %v85 = vmul.f32 %v84, 1.442695
  %v86 = vpow.pop %v85
  %v87 = vadd.f32 %v86, 1.0
  %v88 = vrcp.pop %v87
  %v89 = vmul.f32 1.0, %v88
  %v90 = vmul.f32 %v89, 2.0
  %v91 = vsub.f32 %v90, 1.0
  %93 = vrot.lane.b32.xlu0 %v24, 32
  %v94 = vpop.permute.xlu0 %93
  %v96 = vmul.f32 %v89, %v94
  %98 = vrot.lane.b32.xlu0 %v91, 64
  %v99 = vpop.permute.xlu0 %98
  %v101 = vmul.f32 %v89, %v99
  %103 = vrot.lane.b32.xlu0 %v101, 32
  %v104 = vpop.permute.xlu0 %103
  %v106 = vadd.f32 %v96, %v104
  %v107 = vtanh.pop %v106
  %109 = vrot.lane.b32.xlu0 %v107, 64
  %v110 = vpop.permute.xlu0 %109
  %v112 = vmul.f32 %v89, %v110
  %v113 = vpack.c.bf16 %v112, %v112
  %115 = vrot.lane.b32.xlu0 %v113, 32
  %v116 = vpop.permute.xlu0 %115
  %v118 = vsel %vm38, %v116, 0
  %120 = vmatprep.subr.bf16.mxu0 0
  %121 = vmatpush1.bf16.msra.mxu0 %v34
  %122 = vmatprep.subr.bf16.mxu0 0
  %123 = vmatpush1.bf16.msra.mxu0 %v35
  %124 = vmatprep.subr.bf16.mxu0 0
  %125 = vmatpush1.bf16.msra.mxu0 0
  %126 = vmatprep.subr.bf16.mxu0 0
  %127 = vmatpush1.bf16.msra.mxu0 0
  %128 = vmatprep.subr.bf16.mxu0 0
  %129 = vmatpush1.bf16.msra.mxu0 0
  %130 = vmatprep.subr.bf16.mxu0 0
  %131 = vmatpush1.bf16.msra.mxu0 0
  %132 = vmatprep.subr.bf16.mxu0 0
  %133 = vmatpush1.bf16.msra.mxu0 0
  %134 = vmatprep.subr.bf16.mxu0 0
  %135 = vmatpush1.bf16.msra.mxu0 0
  %136 = vmatprep.subr.bf16.mxu0 0
  %137 = vmatpush1.bf16.msra.mxu0 0
  %138 = vmatprep.subr.bf16.mxu0 0
  %139 = vmatpush1.bf16.msra.mxu0 0
  %140 = vmatprep.subr.bf16.mxu0 0
  %141 = vmatpush1.bf16.msra.mxu0 0
  %142 = vmatprep.subr.bf16.mxu0 0
  %143 = vmatpush1.bf16.msra.mxu0 0
  %144 = vmatprep.subr.bf16.mxu0 0
  %145 = vmatpush1.bf16.msra.mxu0 0
  %146 = vmatprep.subr.bf16.mxu0 0
  %147 = vmatpush1.bf16.msra.mxu0 0
  %148 = vmatprep.subr.bf16.mxu0 0
  %149 = vmatpush1.bf16.msra.mxu0 0
  %150 = vmatprep.subr.bf16.mxu0 0
  %151 = vmatpush1.bf16.msra.mxu0 0
  %152 = vmatprep.mubr.bf16.mxu0 0
  %153 = vmatmul.mubr.bf16.gmra.mrb[0].mxu0 %v118
  %v154 = vpop.f32.mrb[0].mxu0
  %v155 = vadd.f32 0.0, %v154
  %v156 = vpop.f32.mrb[0].mxu0
  %v157 = vpop.f32.mrb[0].mxu0
  %v158 = vpop.f32.mrb[0].mxu0
  %159 = vdwg.mxu0
  %s160 = scalar_lea.vmem %s0, 8
  %v161 = vld [vmem:[%s160] sm:$0xff]
  %v162 = vadd.f32 %v161, %v155
  %v163 = vxor.u32 %v162, 2147483648
  %v164 = vmul.f32 %v163, 1.442695
  %v165 = vpow.pop %v164
  %v166 = vadd.f32 %v165, 1.0
  %v167 = vrcp.pop %v166
  %v168 = vmul.f32 1.0, %v167
  %v169 = vmul.f32 %v168, 2.0
  %v170 = vsub.f32 %v169, 1.0
  %v171 = vmul.f32 %v168, %v106
  %173 = vrot.lane.b32.xlu0 %v170, 64
  %v174 = vpop.permute.xlu0 %173
  %v176 = vmul.f32 %v168, %v174
  %178 = vrot.lane.b32.xlu0 %v176, 32
  %v179 = vpop.permute.xlu0 %178
  %v181 = vadd.f32 %v171, %v179
  %v182 = vtanh.pop %v181
  %184 = vrot.lane.b32.xlu0 %v182, 64
  %v185 = vpop.permute.xlu0 %184
  %v187 = vmul.f32 %v168, %v185
  %v188 = vpack.c.bf16 %v187, %v187
  %190 = vrot.lane.b32.xlu0 %v188, 32
  %v191 = vpop.permute.xlu0 %190
  %v193 = vsel %vm38, %v191, 0
  %195 = vmatprep.subr.bf16.mxu0 0
  %196 = vmatpush1.bf16.msra.mxu0 %v34
  %197 = vmatprep.subr.bf16.mxu0 0
  %198 = vmatpush1.bf16.msra.mxu0 %v35
  %199 = vmatprep.subr.bf16.mxu0 0
  %200 = vmatpush1.bf16.msra.mxu0 0
  %201 = vmatprep.subr.bf16.mxu0 0
  %202 = vmatpush1.bf16.msra.mxu0 0
  %203 = vmatprep.subr.bf16.mxu0 0
  %204 = vmatpush1.bf16.msra.mxu0 0
  %205 = vmatprep.subr.bf16.mxu0 0
  %206 = vmatpush1.bf16.msra.mxu0 0
  %207 = vmatprep.subr.bf16.mxu0 0
  %208 = vmatpush1.bf16.msra.mxu0 0
  %209 = vmatprep.subr.bf16.mxu0 0
  %210 = vmatpush1.bf16.msra.mxu0 0
  %211 = vmatprep.subr.bf16.mxu0 0
  %212 = vmatpush1.bf16.msra.mxu0 0
  %213 = vmatprep.subr.bf16.mxu0 0
  %214 = vmatpush1.bf16.msra.mxu0 0
  %215 = vmatprep.subr.bf16.mxu0 0
  %216 = vmatpush1.bf16.msra.mxu0 0
  %217 = vmatprep.subr.bf16.mxu0 0
  %218 = vmatpush1.bf16.msra.mxu0 0
  %219 = vmatprep.subr.bf16.mxu0 0
  %220 = vmatpush1.bf16.msra.mxu0 0
  %221 = vmatprep.subr.bf16.mxu0 0
  %222 = vmatpush1.bf16.msra.mxu0 0
  %223 = vmatprep.subr.bf16.mxu0 0
  %224 = vmatpush1.bf16.msra.mxu0 0
  %225 = vmatprep.subr.bf16.mxu0 0
  %226 = vmatpush1.bf16.msra.mxu0 0
  %227 = vmatprep.mubr.bf16.mxu0 0
  %228 = vmatmul.mubr.bf16.gmra.mrb[0].mxu0 %v193
  %v229 = vpop.f32.mrb[0].mxu0
  %v230 = vadd.f32 0.0, %v229
  %v231 = vpop.f32.mrb[0].mxu0
  %v232 = vpop.f32.mrb[0].mxu0
  %v233 = vpop.f32.mrb[0].mxu0
  %234 = vdwg.mxu0
  %s235 = scalar_lea.vmem %s0, 16
  %v236 = vld [vmem:[%s235] sm:$0xff]
  %v237 = vadd.f32 %v236, %v230
  %v238 = vxor.u32 %v237, 2147483648
  %v239 = vmul.f32 %v238, 1.442695
  %v240 = vpow.pop %v239
  %v241 = vadd.f32 %v240, 1.0
  %v242 = vrcp.pop %v241
  %v243 = vmul.f32 1.0, %v242
  %v244 = vmul.f32 %v243, 2.0
  %v245 = vsub.f32 %v244, 1.0
  %v246 = vmul.f32 %v243, %v181
  %248 = vrot.lane.b32.xlu0 %v245, 64
  %v249 = vpop.permute.xlu0 %248
  %v251 = vmul.f32 %v243, %v249
  %253 = vrot.lane.b32.xlu0 %v251, 32
  %v254 = vpop.permute.xlu0 %253
  %v256 = vadd.f32 %v246, %v254
  %v257 = vtanh.pop %v256
  %259 = vrot.lane.b32.xlu0 %v257, 64
  %v260 = vpop.permute.xlu0 %259
  %v262 = vmul.f32 %v243, %v260
  %v263 = vpack.c.bf16 %v262, %v262
  %265 = vrot.lane.b32.xlu0 %v263, 32
  %v266 = vpop.permute.xlu0 %265
  %v268 = vsel %vm38, %v266, 0
  %270 = vmatprep.subr.bf16.mxu0 0
  %271 = vmatpush1.bf16.msra.mxu0 %v34
  %272 = vmatprep.subr.bf16.mxu0 0
  %273 = vmatpush1.bf16.msra.mxu0 %v35
  %274 = vmatprep.subr.bf16.mxu0 0
  %275 = vmatpush1.bf16.msra.mxu0 0
  %276 = vmatprep.subr.bf16.mxu0 0
  %277 = vmatpush1.bf16.msra.mxu0 0
  %278 = vmatprep.subr.bf16.mxu0 0
  %279 = vmatpush1.bf16.msra.mxu0 0
  %280 = vmatprep.subr.bf16.mxu0 0
  %281 = vmatpush1.bf16.msra.mxu0 0
  %282 = vmatprep.subr.bf16.mxu0 0
  %283 = vmatpush1.bf16.msra.mxu0 0
  %284 = vmatprep.subr.bf16.mxu0 0
  %285 = vmatpush1.bf16.msra.mxu0 0
  %286 = vmatprep.subr.bf16.mxu0 0
  %287 = vmatpush1.bf16.msra.mxu0 0
  %288 = vmatprep.subr.bf16.mxu0 0
  %289 = vmatpush1.bf16.msra.mxu0 0
  %290 = vmatprep.subr.bf16.mxu0 0
  %291 = vmatpush1.bf16.msra.mxu0 0
  %292 = vmatprep.subr.bf16.mxu0 0
  %293 = vmatpush1.bf16.msra.mxu0 0
  %294 = vmatprep.subr.bf16.mxu0 0
  %295 = vmatpush1.bf16.msra.mxu0 0
  %296 = vmatprep.subr.bf16.mxu0 0
  %297 = vmatpush1.bf16.msra.mxu0 0
  %298 = vmatprep.subr.bf16.mxu0 0
  %299 = vmatpush1.bf16.msra.mxu0 0
  %300 = vmatprep.subr.bf16.mxu0 0
  %301 = vmatpush1.bf16.msra.mxu0 0
  %302 = vmatprep.mubr.bf16.mxu0 0
  %303 = vmatmul.mubr.bf16.gmra.mrb[0].mxu0 %v268
  %v304 = vpop.f32.mrb[0].mxu0
  %v305 = vadd.f32 0.0, %v304
  %v306 = vpop.f32.mrb[0].mxu0
  %v307 = vpop.f32.mrb[0].mxu0
  %v308 = vpop.f32.mrb[0].mxu0
  %309 = vdwg.mxu0
  %s310 = scalar_lea.vmem %s0, 24
  %v311 = vld [vmem:[%s310] sm:$0xff]
  %v312 = vadd.f32 %v311, %v305
  %v313 = vxor.u32 %v312, 2147483648
  %v314 = vmul.f32 %v313, 1.442695
  %v315 = vpow.pop %v314
  %v316 = vadd.f32 %v315, 1.0
  %v317 = vrcp.pop %v316
  %v318 = vmul.f32 1.0, %v317
  %v319 = vmul.f32 %v318, 2.0
  %v320 = vsub.f32 %v319, 1.0
  %v321 = vmul.f32 %v318, %v256
  %323 = vrot.lane.b32.xlu0 %v320, 64
  %v324 = vpop.permute.xlu0 %323
  %v326 = vmul.f32 %v318, %v324
  %328 = vrot.lane.b32.xlu0 %v326, 32
  %v329 = vpop.permute.xlu0 %328
  %v331 = vadd.f32 %v321, %v329
  %v332 = vtanh.pop %v331
  %334 = vrot.lane.b32.xlu0 %v332, 64
  %v335 = vpop.permute.xlu0 %334
  %v337 = vmul.f32 %v318, %v335
  %v338 = vpack.c.bf16 %v337, %v337
  %340 = vrot.lane.b32.xlu0 %v338, 32
  %v341 = vpop.permute.xlu0 %340
  %v343 = vsel %vm38, %v341, 0
  %345 = vmatprep.subr.bf16.mxu0 0
  %346 = vmatpush1.bf16.msra.mxu0 %v34
  %347 = vmatprep.subr.bf16.mxu0 0
  %348 = vmatpush1.bf16.msra.mxu0 %v35
  %349 = vmatprep.subr.bf16.mxu0 0
  %350 = vmatpush1.bf16.msra.mxu0 0
  %351 = vmatprep.subr.bf16.mxu0 0
  %352 = vmatpush1.bf16.msra.mxu0 0
  %353 = vmatprep.subr.bf16.mxu0 0
  %354 = vmatpush1.bf16.msra.mxu0 0
  %355 = vmatprep.subr.bf16.mxu0 0
  %356 = vmatpush1.bf16.msra.mxu0 0
  %357 = vmatprep.subr.bf16.mxu0 0
  %358 = vmatpush1.bf16.msra.mxu0 0
  %359 = vmatprep.subr.bf16.mxu0 0
  %360 = vmatpush1.bf16.msra.mxu0 0
  %361 = vmatprep.subr.bf16.mxu0 0
  %362 = vmatpush1.bf16.msra.mxu0 0
  %363 = vmatprep.subr.bf16.mxu0 0
  %364 = vmatpush1.bf16.msra.mxu0 0
  %365 = vmatprep.subr.bf16.mxu0 0
  %366 = vmatpush1.bf16.msra.mxu0 0
  %367 = vmatprep.subr.bf16.mxu0 0
  %368 = vmatpush1.bf16.msra.mxu0 0
  %369 = vmatprep.subr.bf16.mxu0 0
  %370 = vmatpush1.bf16.msra.mxu0 0
  %371 = vmatprep.subr.bf16.mxu0 0
  %372 = vmatpush1.bf16.msra.mxu0 0
  %373 = vmatprep.subr.bf16.mxu0 0
  %374 = vmatpush1.bf16.msra.mxu0 0
  %375 = vmatprep.subr.bf16.mxu0 0
  %376 = vmatpush1.bf16.msra.mxu0 0
  %377 = vmatprep.mubr.bf16.mxu0 0
  %378 = vmatmul.mubr.bf16.gmra.mrb[0].mxu0 %v343
  %v379 = vpop.f32.mrb[0].mxu0
  %v380 = vadd.f32 0.0, %v379
  %v381 = vpop.f32.mrb[0].mxu0
  %v382 = vpop.f32.mrb[0].mxu0
  %v383 = vpop.f32.mrb[0].mxu0
  %384 = vdwg.mxu0
  %s385 = scalar_lea.vmem %s0, 32
  %v386 = vld [vmem:[%s385] sm:$0xff]
  %v387 = vadd.f32 %v386, %v380
  %v388 = vxor.u32 %v387, 2147483648
  %v389 = vmul.f32 %v388, 1.442695
  %v390 = vpow.pop %v389
  %v391 = vadd.f32 %v390, 1.0
  %v392 = vrcp.pop %v391
  %v393 = vmul.f32 1.0, %v392
  %v394 = vmul.f32 %v393, 2.0
  %v395 = vsub.f32 %v394, 1.0
  %v396 = vmul.f32 %v393, %v331
  %398 = vrot.lane.b32.xlu0 %v395, 64
  %v399 = vpop.permute.xlu0 %398
  %v401 = vmul.f32 %v393, %v399
  %403 = vrot.lane.b32.xlu0 %v401, 32
  %v404 = vpop.permute.xlu0 %403
  %v406 = vadd.f32 %v396, %v404
  %v407 = vtanh.pop %v406
  %409 = vrot.lane.b32.xlu0 %v407, 64
  %v410 = vpop.permute.xlu0 %409
  %v412 = vmul.f32 %v393, %v410
  %v413 = vpack.c.bf16 %v412, %v412
  %415 = vrot.lane.b32.xlu0 %v413, 32
  %v416 = vpop.permute.xlu0 %415
  %v418 = vsel %vm38, %v416, 0
  %420 = vmatprep.subr.bf16.mxu0 0
  %421 = vmatpush1.bf16.msra.mxu0 %v34
  %422 = vmatprep.subr.bf16.mxu0 0
  %423 = vmatpush1.bf16.msra.mxu0 %v35
  %424 = vmatprep.subr.bf16.mxu0 0
  %425 = vmatpush1.bf16.msra.mxu0 0
  %426 = vmatprep.subr.bf16.mxu0 0
  %427 = vmatpush1.bf16.msra.mxu0 0
  %428 = vmatprep.subr.bf16.mxu0 0
  %429 = vmatpush1.bf16.msra.mxu0 0
  %430 = vmatprep.subr.bf16.mxu0 0
  %431 = vmatpush1.bf16.msra.mxu0 0
  %432 = vmatprep.subr.bf16.mxu0 0
  %433 = vmatpush1.bf16.msra.mxu0 0
  %434 = vmatprep.subr.bf16.mxu0 0
  %435 = vmatpush1.bf16.msra.mxu0 0
  %436 = vmatprep.subr.bf16.mxu0 0
  %437 = vmatpush1.bf16.msra.mxu0 0
  %438 = vmatprep.subr.bf16.mxu0 0
  %439 = vmatpush1.bf16.msra.mxu0 0
  %440 = vmatprep.subr.bf16.mxu0 0
  %441 = vmatpush1.bf16.msra.mxu0 0
  %442 = vmatprep.subr.bf16.mxu0 0
  %443 = vmatpush1.bf16.msra.mxu0 0
  %444 = vmatprep.subr.bf16.mxu0 0
  %445 = vmatpush1.bf16.msra.mxu0 0
  %446 = vmatprep.subr.bf16.mxu0 0
  %447 = vmatpush1.bf16.msra.mxu0 0
  %448 = vmatprep.subr.bf16.mxu0 0
  %449 = vmatpush1.bf16.msra.mxu0 0
  %450 = vmatprep.subr.bf16.mxu0 0
  %451 = vmatpush1.bf16.msra.mxu0 0
  %452 = vmatprep.mubr.bf16.mxu0 0
  %453 = vmatmul.mubr.bf16.gmra.mrb[0].mxu0 %v418
  %v454 = vpop.f32.mrb[0].mxu0
  %v455 = vadd.f32 0.0, %v454
  %v456 = vpop.f32.mrb[0].mxu0
  %v457 = vpop.f32.mrb[0].mxu0
  %v458 = vpop.f32.mrb[0].mxu0
  %459 = vdwg.mxu0
  %s460 = scalar_lea.vmem %s0, 40
  %v461 = vld [vmem:[%s460] sm:$0xff]
  %v462 = vadd.f32 %v461, %v455
  %v463 = vxor.u32 %v462, 2147483648
  %v464 = vmul.f32 %v463, 1.442695
  %v465 = vpow.pop %v464
  %v466 = vadd.f32 %v465, 1.0
  %v467 = vrcp.pop %v466
  %v468 = vmul.f32 1.0, %v467
  %v469 = vmul.f32 %v468, 2.0
  %v470 = vsub.f32 %v469, 1.0
  %v471 = vmul.f32 %v468, %v406
  %473 = vrot.lane.b32.xlu0 %v470, 64
  %v474 = vpop.permute.xlu0 %473
  %v476 = vmul.f32 %v468, %v474
  %478 = vrot.lane.b32.xlu0 %v476, 32
  %v479 = vpop.permute.xlu0 %478
  %v481 = vadd.f32 %v471, %v479
  %v482 = vtanh.pop %v481
  %484 = vrot.lane.b32.xlu0 %v482, 64
  %v485 = vpop.permute.xlu0 %484
  %v487 = vmul.f32 %v468, %v485
  %v488 = vpack.c.bf16 %v487, %v487
  %490 = vrot.lane.b32.xlu0 %v488, 32
  %v491 = vpop.permute.xlu0 %490
  %v493 = vsel %vm38, %v491, 0
  %495 = vmatprep.subr.bf16.mxu0 0
  %496 = vmatpush1.bf16.msra.mxu0 %v34
  %497 = vmatprep.subr.bf16.mxu0 0
  %498 = vmatpush1.bf16.msra.mxu0 %v35
  %499 = vmatprep.subr.bf16.mxu0 0
  %500 = vmatpush1.bf16.msra.mxu0 0
  %501 = vmatprep.subr.bf16.mxu0 0
  %502 = vmatpush1.bf16.msra.mxu0 0
  %503 = vmatprep.subr.bf16.mxu0 0
  %504 = vmatpush1.bf16.msra.mxu0 0
  %505 = vmatprep.subr.bf16.mxu0 0
  %506 = vmatpush1.bf16.msra.mxu0 0
  %507 = vmatprep.subr.bf16.mxu0 0
  %508 = vmatpush1.bf16.msra.mxu0 0
  %509 = vmatprep.subr.bf16.mxu0 0
  %510 = vmatpush1.bf16.msra.mxu0 0
  %511 = vmatprep.subr.bf16.mxu0 0
  %512 = vmatpush1.bf16.msra.mxu0 0
  %513 = vmatprep.subr.bf16.mxu0 0
  %514 = vmatpush1.bf16.msra.mxu0 0
  %515 = vmatprep.subr.bf16.mxu0 0
  %516 = vmatpush1.bf16.msra.mxu0 0
  %517 = vmatprep.subr.bf16.mxu0 0
  %518 = vmatpush1.bf16.msra.mxu0 0
  %519 = vmatprep.subr.bf16.mxu0 0
  %520 = vmatpush1.bf16.msra.mxu0 0
  %521 = vmatprep.subr.bf16.mxu0 0
  %522 = vmatpush1.bf16.msra.mxu0 0
  %523 = vmatprep.subr.bf16.mxu0 0
  %524 = vmatpush1.bf16.msra.mxu0 0
  %525 = vmatprep.subr.bf16.mxu0 0
  %526 = vmatpush1.bf16.msra.mxu0 0
  %527 = vmatprep.mubr.bf16.mxu0 0
  %528 = vmatmul.mubr.bf16.gmra.mrb[0].mxu0 %v493
  %v529 = vpop.f32.mrb[0].mxu0
  %v530 = vadd.f32 0.0, %v529
  %v531 = vpop.f32.mrb[0].mxu0
  %v532 = vpop.f32.mrb[0].mxu0
  %v533 = vpop.f32.mrb[0].mxu0
  %534 = vdwg.mxu0
  %s535 = scalar_lea.vmem %s0, 48
  %v536 = vld [vmem:[%s535] sm:$0xff]
  %v537 = vadd.f32 %v536, %v530
  %v538 = vxor.u32 %v537, 2147483648
  %v539 = vmul.f32 %v538, 1.442695
  %v540 = vpow.pop %v539
  %v541 = vadd.f32 %v540, 1.0
  %v542 = vrcp.pop %v541
  %v543 = vmul.f32 1.0, %v542
  %v544 = vmul.f32 %v543, 2.0
  %v545 = vsub.f32 %v544, 1.0
  %v546 = vmul.f32 %v543, %v481
  %548 = vrot.lane.b32.xlu0 %v545, 64
  %v549 = vpop.permute.xlu0 %548
  %v551 = vmul.f32 %v543, %v549
  %553 = vrot.lane.b32.xlu0 %v551, 32
  %v554 = vpop.permute.xlu0 %553
  %v556 = vadd.f32 %v546, %v554
  %v557 = vtanh.pop %v556
  %559 = vrot.lane.b32.xlu0 %v557, 64
  %v560 = vpop.permute.xlu0 %559
  %v562 = vmul.f32 %v543, %v560
  %v563 = vpack.c.bf16 %v562, %v562
  %565 = vrot.lane.b32.xlu0 %v563, 32
  %v566 = vpop.permute.xlu0 %565
  %v568 = vsel %vm38, %v566, 0
  %570 = vmatprep.subr.bf16.mxu0 0
  %571 = vmatpush1.bf16.msra.mxu0 %v34
  %572 = vmatprep.subr.bf16.mxu0 0
  %573 = vmatpush1.bf16.msra.mxu0 %v35
  %574 = vmatprep.subr.bf16.mxu0 0
  %575 = vmatpush1.bf16.msra.mxu0 0
  %576 = vmatprep.subr.bf16.mxu0 0
  %577 = vmatpush1.bf16.msra.mxu0 0
  %578 = vmatprep.subr.bf16.mxu0 0
  %579 = vmatpush1.bf16.msra.mxu0 0
  %580 = vmatprep.subr.bf16.mxu0 0
  %581 = vmatpush1.bf16.msra.mxu0 0
  %582 = vmatprep.subr.bf16.mxu0 0
  %583 = vmatpush1.bf16.msra.mxu0 0
  %584 = vmatprep.subr.bf16.mxu0 0
  %585 = vmatpush1.bf16.msra.mxu0 0
  %586 = vmatprep.subr.bf16.mxu0 0
  %587 = vmatpush1.bf16.msra.mxu0 0
  %588 = vmatprep.subr.bf16.mxu0 0
  %589 = vmatpush1.bf16.msra.mxu0 0
  %590 = vmatprep.subr.bf16.mxu0 0
  %591 = vmatpush1.bf16.msra.mxu0 0
  %592 = vmatprep.subr.bf16.mxu0 0
  %593 = vmatpush1.bf16.msra.mxu0 0
  %594 = vmatprep.subr.bf16.mxu0 0
  %595 = vmatpush1.bf16.msra.mxu0 0
  %596 = vmatprep.subr.bf16.mxu0 0
  %597 = vmatpush1.bf16.msra.mxu0 0
  %598 = vmatprep.subr.bf16.mxu0 0
  %599 = vmatpush1.bf16.msra.mxu0 0
  %600 = vmatprep.subr.bf16.mxu0 0
  %601 = vmatpush1.bf16.msra.mxu0 0
  %602 = vmatprep.mubr.bf16.mxu0 0
  %603 = vmatmul.mubr.bf16.gmra.mrb[0].mxu0 %v568
  %v604 = vpop.f32.mrb[0].mxu0
  %v605 = vadd.f32 0.0, %v604
  %v606 = vpop.f32.mrb[0].mxu0
  %v607 = vpop.f32.mrb[0].mxu0
  %v608 = vpop.f32.mrb[0].mxu0
  %609 = vdwg.mxu0
  %s610 = scalar_lea.vmem %s0, 56
  %v611 = vld [vmem:[%s610] sm:$0xff]
  %v612 = vadd.f32 %v611, %v605
  %v613 = vxor.u32 %v612, 2147483648
  %v614 = vmul.f32 %v613, 1.442695
  %v615 = vpow.pop %v614
  %v616 = vadd.f32 %v615, 1.0
  %v617 = vrcp.pop %v616
  %v618 = vmul.f32 1.0, %v617
  %v619 = vmul.f32 %v618, 2.0
  %v620 = vsub.f32 %v619, 1.0
  %v621 = vmul.f32 %v618, %v556
  %623 = vrot.lane.b32.xlu0 %v620, 64
  %v624 = vpop.permute.xlu0 %623
  %v626 = vmul.f32 %v618, %v624
  %628 = vrot.lane.b32.xlu0 %v626, 32
  %v629 = vpop.permute.xlu0 %628
  %v631 = vadd.f32 %v621, %v629
  %v632 = vtanh.pop %v631
  %634 = vrot.lane.b32.xlu0 %v632, 64
  %v635 = vpop.permute.xlu0 %634
  %v637 = vmul.f32 %v618, %v635
  %639 = vrot.lane.b32.xlu0 %v637, 32
  %v640 = vpop.permute.xlu0 %639
  %642 = vst.msk [vmem:[#allocation2] sm:$0xff] %vm38, %v640
  %644 = vrot.lane.b32.xlu0 %v631, 96
  %v645 = vpop.permute.xlu0 %644
  %647 = vst.msk [vmem:[#allocation3] sm:$0xff] %vm38, %v645
  // Predicated region
  $region14: #{char_lstm_forward.1} parent=0 // pred_check
    %p648 = pneg %p12
  $region15: #{char_lstm_forward.1} parent=0 // pred_check_branch
    %650 = sbr.rel (%p648) target = $region17
  $region16: #{char_lstm_forward.1} parent=0 // pred_region
    %651 = vst.msk [vmem:[%s2] sm:$0xff] %vm38, %v640
  $region17: #{char_lstm_forward.1} parent=0 // pred_fallthru
    _
  // Predicated region
  $region18: #{char_lstm_forward.1} parent=0 // pred_check
    _
  $region19: #{char_lstm_forward.1} parent=0 // pred_check_branch
    %653 = sbr.rel (0) target = $region21
  $region20: #{char_lstm_forward.1} parent=0 // pred_region
    _
  $region21: #{char_lstm_forward.1} parent=0 // pred_fallthru
    _
  // Predicated region
  $region22: #{char_lstm_forward.1} parent=0 // pred_check
    _
  $region23: #{char_lstm_forward.1} parent=0 // pred_check_branch
    %655 = sbr.rel (0) target = $region25
  $region24: #{char_lstm_forward.1} parent=0 // pred_region
    _
  $region25: #{char_lstm_forward.1} parent=0 // pred_fallthru
    _

</llo_original>
